<compile_context>
chip_gen: v6e
topology: v6e:2x2x1
jax: 0.10.0
libtpu: 0.0.40
codegen_flags: <defaults>
</compile_context>

<pallas_src>
import functools

import jax
import jax.numpy as jnp
from jax.experimental import pallas as pl
from jax.experimental.pallas import tpu as pltpu

_LANE_ALIGN = 256                 # v6e/v7x MXU is 2x256x256; extra zero cols free on v5e
_VMEM_LIMIT = 48 * 1024 * 1024    # fits every generation (v7x: 64 MiB per TensorCore)


def _round_up(n, m):
    return ((n + m - 1) // m) * m


def _pad2(a, shape):
    return jnp.pad(a, [(0, s - d) for d, s in zip(a.shape, shape)])


# ---------------------------------------------------------------------------
# Root encoder (synthetic): global average pool, one pallas_call per crop group.
# x is laid out (B, HW, C): C lane-dense, HW padded only to a multiple of 8.
# ---------------------------------------------------------------------------
def _pool_kernel(x_ref, feat_ref, *, inv_hw):
    # Padded spatial rows are zero, so sum * (1/HW_valid) == exact per-crop mean.
    s = jnp.sum(x_ref[...].astype(jnp.float32), axis=1)        # (tb, C) f32 accumulation
    feat_ref[...] = (s * inv_hw).astype(feat_ref.dtype)


def _pool_group(x, compute_dtype, pool_tile=32):
    B, C, H, W = x.shape
    n = H * W
    hwp = _round_up(n, 8)
    xr = x.astype(compute_dtype).reshape(B, C, n)
    xr = jnp.transpose(xr, (0, 2, 1))                          # (B, HW, C), layout plumbing
    xr = jnp.pad(xr, ((0, 0), (0, hwp - n), (0, 0)))
    tb = min(pool_tile, _round_up(B, 8))
    bp = _round_up(B, tb)
    if bp != B:
        xr = jnp.pad(xr, ((0, bp - B), (0, 0), (0, 0)))

    feat = pl.pallas_call(
        functools.partial(_pool_kernel, inv_hw=1.0 / n),
        out_shape=jax.ShapeDtypeStruct((bp, C), compute_dtype),
        grid=(bp // tb,),
        in_specs=[pl.BlockSpec((tb, hwp, C), lambda i: (i, 0, 0))],
        out_specs=pl.BlockSpec((tb, C), lambda i: (i, 0)),
        compiler_params=pltpu.CompilerParams(
            dimension_semantics=("parallel",),
            vmem_limit_bytes=_VMEM_LIMIT),
    )(xr)
    return feat[:B]


# ---------------------------------------------------------------------------
# Head pass 1: Linear1 + BatchNorm batch statistics (sum / sum-of-squares).
# ---------------------------------------------------------------------------
def _linear1_stats_kernel(feat_ref, w1_ref, slab_ref, h_ref, stats_ref, *,
                          n_valid, n_padded, tile_rows):
    i = pl.program_id(0)

    @pl.when(i == 0)
    def _():
        stats_ref[...] = jnp.zeros_like(stats_ref)

    hp = w1_ref.shape[1]
    b1 = slab_ref[0:1, :hp]
    h = jnp.dot(feat_ref[...], w1_ref[...],
                preferred_element_type=jnp.float32) + b1        # (tile_rows, Hp) f32
    h_ref[...] = h

    if n_padded == n_valid:
        hm = h
    else:  # mask zero-padded batch rows out of the BN statistics
        row = i * tile_rows + jax.lax.broadcasted_iota(jnp.int32, h.shape, 0)
        hm = jnp.where(row < n_valid, h, 0.0)

    stats_ref[0:1, :] += jnp.sum(hm, axis=0, keepdims=True)        # sum(h)
    stats_ref[1:2, :] += jnp.sum(hm * h, axis=0, keepdims=True)    # sum(h^2) (masked)


# ---------------------------------------------------------------------------
# Head pass 2: BN apply + ReLU + Linear2 + L2-normalize + prototype scores.
# ---------------------------------------------------------------------------
def _head_apply_kernel(h_ref, stats_ref, slab_ref, w2_ref, wp_ref,
                       out_ref, scores_ref, *, n_valid):
    hp, fp = w2_ref.shape
    gamma = slab_ref[1:2, :hp]
    beta = slab_ref[2:3, :hp]
    b2 = slab_ref[3:4, :fp]
    cd = w2_ref.dtype

    inv_n = 1.0 / n_valid
    mean = stats_ref[0:1, :] * inv_n
    var = stats_ref[1:2, :] * inv_n - mean * mean                # E[h^2] - E[h]^2 (f32)
    scale = jax.lax.rsqrt(var + 1e-5) * gamma                    # BatchNorm1d training mode

    h = h_ref[...]
    r = jnp.maximum((h - mean) * scale + beta, 0.0)              # BN + ReLU
    z = jnp.dot(r.astype(cd), w2_ref[...],
                preferred_element_type=jnp.float32) + b2         # (tile, Fp)

    # F.normalize(dim=1, p=2): z / max(||z||, 1e-12) == z * rsqrt(max(sumsq, 1e-24))
    sumsq = jnp.sum(z * z, axis=1, keepdims=True)
    zn = z * jax.lax.rsqrt(jnp.maximum(sumsq, 1e-24))

    out_ref[...] = zn.astype(out_ref.dtype)
    scores_ref[...] = jnp.dot(zn.astype(cd), wp_ref[...],
                              preferred_element_type=jnp.float32)


# ---------------------------------------------------------------------------
# Projection head + prototypes wrapper: batch-tiled, two-pass BatchNorm.
# ---------------------------------------------------------------------------
def swav_head(feat, params, compute_dtype=jnp.bfloat16, batch_tile=128):
    TB, C = feat.shape
    Hm = params["w1"].shape[1]
    Fd = params["w2"].shape[1]
    K = params["wp"].shape[1]
    Hp, Fp, Kp = (_round_up(d, _LANE_ALIGN) for d in (Hm, Fd, K))
    P = max(Hp, Fp)

    tbt = _round_up(min(batch_tile, _round_up(TB, 8)), 8)
    tbp = _round_up(TB, tbt)
    nb = tbp // tbt
    featp = _pad2(feat, (tbp, C))

    # Zero-padded, lane-dense weights in compute dtype (pad rows/cols contribute 0).
    w1p = _pad2(params["w1"], (C, Hp)).astype(compute_dtype)
    w2p = _pad2(params["w2"], (Hp, Fp)).astype(compute_dtype)
    wpp = _pad2(params["wp"], (Fp, Kp)).astype(compute_dtype)

    # b1 / gamma / beta / b2 packed into one (8, P) f32 slab -> one small DMA.
    slab = jnp.zeros((8, P), jnp.float32)
    slab = slab.at[0, :Hm].set(params["b1"].reshape(-1))
    slab = slab.at[1, :Hm].set(params["gamma"].reshape(-1))
    slab = slab.at[2, :Hm].set(params["beta"].reshape(-1))
    slab = slab.at[3, :Fd].set(params["b2"].reshape(-1))

    itemsize = jnp.dtype(compute_dtype).itemsize

    # ---- pass 1: Linear1 + BN statistics (reduction over batch tiles) ----
    h, stats = pl.pallas_call(
        functools.partial(_linear1_stats_kernel,
                          n_valid=TB, n_padded=tbp, tile_rows=tbt),
        out_shape=(jax.ShapeDtypeStruct((tbp, Hp), jnp.float32),
                   jax.ShapeDtypeStruct((2, Hp), jnp.float32)),
        grid=(nb,),
        in_specs=[
            pl.BlockSpec((tbt, C), lambda i: (i, 0)),
            pl.BlockSpec((C, Hp), lambda i: (0, 0)),     # loop-invariant weights
            pl.BlockSpec((8, P), lambda i: (0, 0)),
        ],
        out_specs=[pl.BlockSpec((tbt, Hp), lambda i: (i, 0)),
                   pl.BlockSpec((2, Hp), lambda i: (0, 0))],
        compiler_params=pltpu.CompilerParams(
            dimension_semantics=("arbitrary",),          # stats accumulate sequentially
            vmem_limit_bytes=_VMEM_LIMIT),
        cost_estimate=pl.CostEstimate(
            flops=2 * tbp * C * Hp,
            transcendentals=0,
            bytes_accessed=tbp * C * itemsize + C * Hp * itemsize
            + 8 * P * 4 + tbp * Hp * 4 + 2 * Hp * 4),
    )(featp, w1p, slab)

    # ---- pass 2: BN apply + ReLU + Linear2 + normalize + prototypes ----
    out_p, scores_p = pl.pallas_call(
        functools.partial(_head_apply_kernel, n_valid=TB),
        out_shape=(jax.ShapeDtypeStruct((tbp, Fp), jnp.float32),
                   jax.ShapeDtypeStruct((tbp, Kp), jnp.float32)),
        grid=(nb,),
        in_specs=[
            pl.BlockSpec((tbt, Hp), lambda i: (i, 0)),
            pl.BlockSpec((2, Hp), lambda i: (0, 0)),
            pl.BlockSpec((8, P), lambda i: (0, 0)),
            pl.BlockSpec((Hp, Fp), lambda i: (0, 0)),
            pl.BlockSpec((Fp, Kp), lambda i: (0, 0)),
        ],
        out_specs=[pl.BlockSpec((tbt, Fp), lambda i: (i, 0)),
                   pl.BlockSpec((tbt, Kp), lambda i: (i, 0))],
        compiler_params=pltpu.CompilerParams(
            dimension_semantics=("parallel",),           # independent tiles -> v7x megacore
            vmem_limit_bytes=_VMEM_LIMIT),
        cost_estimate=pl.CostEstimate(
            flops=2 * tbp * (Hp * Fp + Fp * Kp),
            transcendentals=Hp + tbp,
            bytes_accessed=tbp * Hp * 4 + 2 * Hp * 4 + 8 * P * 4
            + Hp * Fp * itemsize + Fp * Kp * itemsize
            + tbp * Fp * 4 + tbp * Kp * 4),
    )(h, stats, slab, w2p, wpp)

    return out_p[:TB, :Fd], scores_p[:TB, :K]


# ---------------------------------------------------------------------------
# Full forward: mirrors torch.unique_consecutive(...)+cumsum crop grouping.
# ---------------------------------------------------------------------------
def swav_forward(inputs, params, compute_dtype=jnp.bfloat16, batch_tile=128):
    if not isinstance(inputs, (list, tuple)):
        inputs = [inputs]
    # Group consecutive crops with the same last-dim resolution; run the root
    # (here: global average pool) once per group with that group's own HW.
    groups = []
    for x in inputs:
        if groups and groups[-1][0] == x.shape[-1]:
            groups[-1][1].append(x)
        else:
            groups.append([x.shape[-1], [x]])
    feats = [_pool_group(jnp.concatenate(xs, axis=0), compute_dtype)
             for _, xs in groups]
    feat = jnp.concatenate(feats, axis=0)               # (total_B, C)
    return swav_head(feat, params, compute_dtype=compute_dtype,
                     batch_tile=batch_tile)


# ---------------------------------------------------------------------------
# Deterministic parameter init (synthetic; module __init__ gives the shapes).
# ---------------------------------------------------------------------------
def init_params(key, enc_out, hidden_mlp, feat_dim, nmb_prototypes):
    k1, k2, k3, k4, k5 = jax.random.split(key, 5)
    return {
        "w1": jax.random.normal(k1, (enc_out, hidden_mlp), jnp.float32) * 0.1,
        "b1": jax.random.normal(k2, (1, hidden_mlp), jnp.float32) * 0.1,
        "gamma": jnp.ones((1, hidden_mlp), jnp.float32),   # BatchNorm1d defaults
        "beta": jnp.zeros((1, hidden_mlp), jnp.float32),
        "w2": jax.random.normal(k3, (hidden_mlp, feat_dim), jnp.float32) * 0.1,
        "b2": jax.random.normal(k4, (1, feat_dim), jnp.float32) * 0.1,
        "wp": jax.random.normal(k5, (feat_dim, nmb_prototypes), jnp.float32) * 0.1,
    }


# Pure-JAX reference of the same forward (for correctness validation).
def _reference(inputs, params):
    feats = []
    for x in inputs:
        b, c, h, w = x.shape
        feats.append(jnp.mean(x.reshape(b, c, h * w), axis=-1))
    feat = jnp.concatenate(feats, axis=0)
    h1 = feat @ params["w1"] + params["b1"]
    mean = jnp.mean(h1, axis=0, keepdims=True)
    var = jnp.mean((h1 - mean) ** 2, axis=0, keepdims=True)
    hn = (h1 - mean) / jnp.sqrt(var + 1e-5) * params["gamma"] + params["beta"]
    r = jnp.maximum(hn, 0.0)
    z = r @ params["w2"] + params["b2"]
    n = jnp.sqrt(jnp.sum(z * z, axis=1, keepdims=True))
    zn = z / jnp.maximum(n, 1e-12)
    return zn, zn @ params["wp"]


if __name__ == "__main__":
    key = jax.random.PRNGKey(0)
    kp, ka, kb, kc = jax.random.split(key, 4)

    enc_out_channels = 8          # == C of the synthetic root encoder
    hidden_mlp = 32
    feat_dim = 16
    nmb_prototypes = 24
    batch_per_crop = 2

    params = init_params(kp, enc_out_channels, hidden_mlp, feat_dim, nmb_prototypes)

    # Multi-crop inputs (NCHW): two large 16x16 crops, one small 8x8 crop.
    inputs = [
        jax.random.normal(ka, (batch_per_crop, enc_out_channels, 16, 16), jnp.float32),
        jax.random.normal(kb, (batch_per_crop, enc_out_channels, 16, 16), jnp.float32),
        jax.random.normal(kc, (batch_per_crop, enc_out_channels, 8, 8), jnp.float32),
    ]
    total_b = 3 * batch_per_crop

    emb_ref, scores_ref = _reference(inputs, params)

    # 1) f32 run: exact-math validation of the fused pipeline
    #    (pooling layout, two-pass BN, padding/masking).
    emb32, sc32 = swav_forward(inputs, params, compute_dtype=jnp.float32)
    jax.block_until_ready(emb32)
    jax.block_until_ready(sc32)
    assert emb32.shape == (total_b, feat_dim)
    assert sc32.shape == (total_b, nmb_prototypes)
    assert bool(jnp.allclose(emb32, emb_ref, atol=1e-4, rtol=1e-4))
    assert bool(jnp.allclose(sc32, scores_ref, atol=1e-4, rtol=1e-4))

    # 2) default bf16 run (MXU-native operands / bf16 x stream; pooling sum,
    #    matmul accumulation and BN statistics stay f32).
    emb, scores = swav_forward(inputs, params)
    jax.block_until_ready(emb)
    jax.block_until_ready(scores)
    assert emb.shape == (total_b, feat_dim)
    assert scores.shape == (total_b, nmb_prototypes)
    norms = jnp.linalg.norm(emb, axis=1)
    assert bool(jnp.all(jnp.abs(norms - 1.0) < 1e-3))
    assert bool(jnp.max(jnp.abs(emb - emb_ref)) < 0.1)
    assert bool(jnp.max(jnp.abs(scores - scores_ref)) < 0.1)

    print("KERNEL_OK")
</pallas_src>

<mosaic_0001>
module attributes {stable_mosaic.version = 11 : i64} {
  func.func @_pool_kernel(%arg0: i32, %arg1: memref<8x256x8xf32, #tpu.memory_space<vmem>>, %arg2: memref<8x8xf32, #tpu.memory_space<vmem>>) attributes {dimension_semantics = [#tpu.dimension_semantics<parallel>], iteration_bounds = array<i64: 1>, scalar_prefetch = 0 : i64, scratch_operands = 0 : i64, tpu.core_type = #tpu.core_type<tc>, window_params = [{transform_indices = @transform_0, window_bounds = array<i64: 8, 256, 8>}, {transform_indices = @transform_1, window_bounds = array<i64: 8, 8>}]} {
    %c0 = arith.constant 0 : index
    %c0_0 = arith.constant 0 : index
    %c0_1 = arith.constant 0 : index
    %0 = vector.load %arg1[%c0, %c0_0, %c0_1] : memref<8x256x8xf32, #tpu.memory_space<vmem>>, vector<8x256x8xf32>
    %cst = arith.constant dense<0.000000e+00> : vector<8x8xf32>
    %1 = vector.multi_reduction <add>, %0, %cst [1] : vector<8x256x8xf32> to vector<8x8xf32>
    %cst_2 = arith.constant 3.906250e-03 : f32
    %2 = vector.broadcast %cst_2 : f32 to vector<8x8xf32>
    %3 = arith.mulf %1, %2 : vector<8x8xf32>
    %c0_3 = arith.constant 0 : index
    %c0_4 = arith.constant 0 : index
    %4 = vector.load %arg2[%c0_3, %c0_4] : memref<8x8xf32, #tpu.memory_space<vmem>>, vector<8x8xf32>
    tpu.vector_store %arg2[%c0_3, %c0_4], %3 {strides = array<i32>} : memref<8x8xf32, #tpu.memory_space<vmem>>, vector<8x8xf32>,
    return
  }
  func.func @transform_0(%arg0: i32) -> (i32, i32, i32) {
    %c0_i32 = arith.constant 0 : i32
    %c0_i32_0 = arith.constant 0 : i32
    %c0_i32_1 = arith.constant 0 : i32
    return %arg0, %c0_i32, %c0_i32_0 : i32, i32, i32
  }
  func.func @transform_1(%arg0: i32) -> (i32, i32) {
    %c0_i32 = arith.constant 0 : i32
    %c0_i32_0 = arith.constant 0 : i32
    return %arg0, %c0_i32 : i32, i32
  }
}

</mosaic_0001>

<llo_original>
// kernel: tpu_custom_call.1
$region0: #{tpu_custom_call.1}
  #allocation0 [shape = 'u32[]', space=smem, size = 0x4, offset = 0x4, fixed_abs, tag = 'smem constant byte address 0x4 - core index']
  #allocation1 [shape = 'u32[144,128]{1,0:T(1,128)}', space=vmem, size = 0x12000, scoped, tag = 'internal scratch']
  %s0 = inlined_call_operand.vmem [shape: f32[8,256,8], index: 0, kind: input, shape index: {}]
  %s1 = inlined_call_operand.hbm [shape: f32[8,8], index: 1, kind: output, shape index: {}]
  %s2 = sld [smem:[#allocation0]]
  $region14: #{tpu_custom_call.1} parent=0
    _
  %s4 = ssub.s32 1, %s2
  %s5 = scalar_select 0, %s4, %s2
  $region1: #{tpu_custom_call.1} parent=0
    #allocation2 [shape = 'u8[4096]{0}', space=vmem, size = 0x1000, scoped, tag = 'output window, operand 0, single buffered']
    #allocation3 [shape = 's32[1]{0}', space=sflag, size = 0x4, scoped, tag = 'scoped memory for tpu_custom_call.1']
    %6 = vsyncpa [#allocation3], 0
    // Predicated region
    $region2: #{tpu_custom_call.1} parent=1 // pred_check
      _
    $region3: #{tpu_custom_call.1} parent=1 // pred_check_branch
      %8 = sbr.rel (0) target = $region5
    $region4: #{tpu_custom_call.1} parent=1 // pred_region
      _
    $region5: #{tpu_custom_call.1} parent=1 // pred_fallthru
      _
    %v9 = vld [vmem:[%s0] sm:$0xff]
    %v10 = vld [vmem:[%s0 + $0x8] sm:$0xff]
    %v11 = vld [vmem:[%s0 + $0x10] sm:$0xff]
    %v12 = vld [vmem:[%s0 + $0x18] sm:$0xff]
    %v13 = vld [vmem:[%s0 + $0x20] sm:$0xff]
    %v14 = vld [vmem:[%s0 + $0x28] sm:$0xff]
    %v15 = vld [vmem:[%s0 + $0x30] sm:$0xff]
    %v16 = vld [vmem:[%s0 + $0x38] sm:$0xff]
    %v17 = vld [vmem:[%s0 + $0x40] sm:$0xff]
    %v18 = vld [vmem:[%s0 + $0x48] sm:$0xff]
    %v19 = vld [vmem:[%s0 + $0x50] sm:$0xff]
    %v20 = vld [vmem:[%s0 + $0x58] sm:$0xff]
    %v21 = vld [vmem:[%s0 + $0x60] sm:$0xff]
    %v22 = vld [vmem:[%s0 + $0x68] sm:$0xff]
    %v23 = vld [vmem:[%s0 + $0x70] sm:$0xff]
    %v24 = vld [vmem:[%s0 + $0x78] sm:$0xff]
    %v25 = vld [vmem:[%s0 + $0x80] sm:$0xff]
    %v26 = vld [vmem:[%s0 + $0x88] sm:$0xff]
    %v27 = vld [vmem:[%s0 + $0x90] sm:$0xff]
    %v28 = vld [vmem:[%s0 + $0x98] sm:$0xff]
    %v29 = vld [vmem:[%s0 + $0xa0] sm:$0xff]
    %v30 = vld [vmem:[%s0 + $0xa8] sm:$0xff]
    %v31 = vld [vmem:[%s0 + $0xb0] sm:$0xff]
    %v32 = vld [vmem:[%s0 + $0xb8] sm:$0xff]
    %v33 = vld [vmem:[%s0 + $0xc0] sm:$0xff]
    %v34 = vld [vmem:[%s0 + $0xc8] sm:$0xff]
    %v35 = vld [vmem:[%s0 + $0xd0] sm:$0xff]
    %v36 = vld [vmem:[%s0 + $0xd8] sm:$0xff]
    %v37 = vld [vmem:[%s0 + $0xe0] sm:$0xff]
    %v38 = vld [vmem:[%s0 + $0xe8] sm:$0xff]
    %v39 = vld [vmem:[%s0 + $0xf0] sm:$0xff]
    %v40 = vld [vmem:[%s0 + $0xf8] sm:$0xff]
    %v41 = vld [vmem:[%s0 + $0x100] sm:$0xff]
    %v42 = vld [vmem:[%s0 + $0x108] sm:$0xff]
    %v43 = vld [vmem:[%s0 + $0x110] sm:$0xff]
    %v44 = vld [vmem:[%s0 + $0x118] sm:$0xff]
    %v45 = vld [vmem:[%s0 + $0x120] sm:$0xff]
    %v46 = vld [vmem:[%s0 + $0x128] sm:$0xff]
    %v47 = vld [vmem:[%s0 + $0x130] sm:$0xff]
    %v48 = vld [vmem:[%s0 + $0x138] sm:$0xff]
    %v49 = vld [vmem:[%s0 + $0x140] sm:$0xff]
    %v50 = vld [vmem:[%s0 + $0x148] sm:$0xff]
    %v51 = vld [vmem:[%s0 + $0x150] sm:$0xff]
    %v52 = vld [vmem:[%s0 + $0x158] sm:$0xff]
    %v53 = vld [vmem:[%s0 + $0x160] sm:$0xff]
    %v54 = vld [vmem:[%s0 + $0x168] sm:$0xff]
    %v55 = vld [vmem:[%s0 + $0x170] sm:$0xff]
    %v56 = vld [vmem:[%s0 + $0x178] sm:$0xff]
    %v57 = vld [vmem:[%s0 + $0x180] sm:$0xff]
    %v58 = vld [vmem:[%s0 + $0x188] sm:$0xff]
    %v59 = vld [vmem:[%s0 + $0x190] sm:$0xff]
    %v60 = vld [vmem:[%s0 + $0x198] sm:$0xff]
    %v61 = vld [vmem:[%s0 + $0x1a0] sm:$0xff]
    %v62 = vld [vmem:[%s0 + $0x1a8] sm:$0xff]
    %v63 = vld [vmem:[%s0 + $0x1b0] sm:$0xff]
    %v64 = vld [vmem:[%s0 + $0x1b8] sm:$0xff]
    %v65 = vld [vmem:[%s0 + $0x1c0] sm:$0xff]
    %v66 = vld [vmem:[%s0 + $0x1c8] sm:$0xff]
    %v67 = vld [vmem:[%s0 + $0x1d0] sm:$0xff]
    %v68 = vld [vmem:[%s0 + $0x1d8] sm:$0xff]
    %v69 = vld [vmem:[%s0 + $0x1e0] sm:$0xff]
    %v70 = vld [vmem:[%s0 + $0x1e8] sm:$0xff]
    %v71 = vld [vmem:[%s0 + $0x1f0] sm:$0xff]
    %v72 = vld [vmem:[%s0 + $0x1f8] sm:$0xff]
    %v73 = vld [vmem:[%s0 + $0x200] sm:$0xff]
    %v74 = vld [vmem:[%s0 + $0x208] sm:$0xff]
    %v75 = vld [vmem:[%s0 + $0x210] sm:$0xff]
    %v76 = vld [vmem:[%s0 + $0x218] sm:$0xff]
    %v77 = vld [vmem:[%s0 + $0x220] sm:$0xff]
    %v78 = vld [vmem:[%s0 + $0x228] sm:$0xff]
    %v79 = vld [vmem:[%s0 + $0x230] sm:$0xff]
    %v80 = vld [vmem:[%s0 + $0x238] sm:$0xff]
    %v81 = vld [vmem:[%s0 + $0x240] sm:$0xff]
    %v82 = vld [vmem:[%s0 + $0x248] sm:$0xff]
    %v83 = vld [vmem:[%s0 + $0x250] sm:$0xff]
    %v84 = vld [vmem:[%s0 + $0x258] sm:$0xff]
    %v85 = vld [vmem:[%s0 + $0x260] sm:$0xff]
    %v86 = vld [vmem:[%s0 + $0x268] sm:$0xff]
    %v87 = vld [vmem:[%s0 + $0x270] sm:$0xff]
    %v88 = vld [vmem:[%s0 + $0x278] sm:$0xff]
    %v89 = vld [vmem:[%s0 + $0x280] sm:$0xff]
    %v90 = vld [vmem:[%s0 + $0x288] sm:$0xff]
    %v91 = vld [vmem:[%s0 + $0x290] sm:$0xff]
    %v92 = vld [vmem:[%s0 + $0x298] sm:$0xff]
    %v93 = vld [vmem:[%s0 + $0x2a0] sm:$0xff]
    %v94 = vld [vmem:[%s0 + $0x2a8] sm:$0xff]
    %v95 = vld [vmem:[%s0 + $0x2b0] sm:$0xff]
    %v96 = vld [vmem:[%s0 + $0x2b8] sm:$0xff]
    %v97 = vld [vmem:[%s0 + $0x2c0] sm:$0xff]
    %v98 = vld [vmem:[%s0 + $0x2c8] sm:$0xff]
    %v99 = vld [vmem:[%s0 + $0x2d0] sm:$0xff]
    %v100 = vld [vmem:[%s0 + $0x2d8] sm:$0xff]
    %v101 = vld [vmem:[%s0 + $0x2e0] sm:$0xff]
    %v102 = vld [vmem:[%s0 + $0x2e8] sm:$0xff]
    %v103 = vld [vmem:[%s0 + $0x2f0] sm:$0xff]
    %v104 = vld [vmem:[%s0 + $0x2f8] sm:$0xff]
    %v105 = vld [vmem:[%s0 + $0x300] sm:$0xff]
    %v106 = vld [vmem:[%s0 + $0x308] sm:$0xff]
    %v107 = vld [vmem:[%s0 + $0x310] sm:$0xff]
    %v108 = vld [vmem:[%s0 + $0x318] sm:$0xff]
    %v109 = vld [vmem:[%s0 + $0x320] sm:$0xff]
    %v110 = vld [vmem:[%s0 + $0x328] sm:$0xff]
    %v111 = vld [vmem:[%s0 + $0x330] sm:$0xff]
    %v112 = vld [vmem:[%s0 + $0x338] sm:$0xff]
    %v113 = vld [vmem:[%s0 + $0x340] sm:$0xff]
    %v114 = vld [vmem:[%s0 + $0x348] sm:$0xff]
    %v115 = vld [vmem:[%s0 + $0x350] sm:$0xff]
    %v116 = vld [vmem:[%s0 + $0x358] sm:$0xff]
    %v117 = vld [vmem:[%s0 + $0x360] sm:$0xff]
    %v118 = vld [vmem:[%s0 + $0x368] sm:$0xff]
    %v119 = vld [vmem:[%s0 + $0x370] sm:$0xff]
    %v120 = vld [vmem:[%s0 + $0x378] sm:$0xff]
    %v121 = vld [vmem:[%s0 + $0x380] sm:$0xff]
    %v122 = vld [vmem:[%s0 + $0x388] sm:$0xff]
    %v123 = vld [vmem:[%s0 + $0x390] sm:$0xff]
    %v124 = vld [vmem:[%s0 + $0x398] sm:$0xff]
    %v125 = vld [vmem:[%s0 + $0x3a0] sm:$0xff]
    %v126 = vld [vmem:[%s0 + $0x3a8] sm:$0xff]
    %v127 = vld [vmem:[%s0 + $0x3b0] sm:$0xff]
    %v128 = vld [vmem:[%s0 + $0x3b8] sm:$0xff]
    %v129 = vld [vmem:[%s0 + $0x3c0] sm:$0xff]
    %v130 = vld [vmem:[%s0 + $0x3c8] sm:$0xff]
    %v131 = vld [vmem:[%s0 + $0x3d0] sm:$0xff]
    %v132 = vld [vmem:[%s0 + $0x3d8] sm:$0xff]
    %v133 = vld [vmem:[%s0 + $0x3e0] sm:$0xff]
    %v134 = vld [vmem:[%s0 + $0x3e8] sm:$0xff]
    %v135 = vld [vmem:[%s0 + $0x3f0] sm:$0xff]
    %v136 = vld [vmem:[%s0 + $0x3f8] sm:$0xff]
    %v137 = vld [vmem:[%s0 + $0x400] sm:$0xff]
    %v138 = vld [vmem:[%s0 + $0x408] sm:$0xff]
    %v139 = vld [vmem:[%s0 + $0x410] sm:$0xff]
    %v140 = vld [vmem:[%s0 + $0x418] sm:$0xff]
    %v141 = vld [vmem:[%s0 + $0x420] sm:$0xff]
    %v142 = vld [vmem:[%s0 + $0x428] sm:$0xff]
    %v143 = vld [vmem:[%s0 + $0x430] sm:$0xff]
    %v144 = vld [vmem:[%s0 + $0x438] sm:$0xff]
    %v145 = vld [vmem:[%s0 + $0x440] sm:$0xff]
    %v146 = vld [vmem:[%s0 + $0x448] sm:$0xff]
    %v147 = vld [vmem:[%s0 + $0x450] sm:$0xff]
    %v148 = vld [vmem:[%s0 + $0x458] sm:$0xff]
    %v149 = vld [vmem:[%s0 + $0x460] sm:$0xff]
    %v150 = vld [vmem:[%s0 + $0x468] sm:$0xff]
    %v151 = vld [vmem:[%s0 + $0x470] sm:$0xff]
    %v152 = vld [vmem:[%s0 + $0x478] sm:$0xff]
    %v153 = vld [vmem:[%s0 + $0x480] sm:$0xff]
    %v154 = vld [vmem:[%s0 + $0x488] sm:$0xff]
    %v155 = vld [vmem:[%s0 + $0x490] sm:$0xff]
    %v156 = vld [vmem:[%s0 + $0x498] sm:$0xff]
    %v157 = vld [vmem:[%s0 + $0x4a0] sm:$0xff]
    %v158 = vld [vmem:[%s0 + $0x4a8] sm:$0xff]
    %v159 = vld [vmem:[%s0 + $0x4b0] sm:$0xff]
    %v160 = vld [vmem:[%s0 + $0x4b8] sm:$0xff]
    %v161 = vld [vmem:[%s0 + $0x4c0] sm:$0xff]
    %v162 = vld [vmem:[%s0 + $0x4c8] sm:$0xff]
    %v163 = vld [vmem:[%s0 + $0x4d0] sm:$0xff]
    %v164 = vld [vmem:[%s0 + $0x4d8] sm:$0xff]
    %v165 = vld [vmem:[%s0 + $0x4e0] sm:$0xff]
    %v166 = vld [vmem:[%s0 + $0x4e8] sm:$0xff]
    %v167 = vld [vmem:[%s0 + $0x4f0] sm:$0xff]
    %v168 = vld [vmem:[%s0 + $0x4f8] sm:$0xff]
    %v169 = vld [vmem:[%s0 + $0x500] sm:$0xff]
    %v170 = vld [vmem:[%s0 + $0x508] sm:$0xff]
    %v171 = vld [vmem:[%s0 + $0x510] sm:$0xff]
    %v172 = vld [vmem:[%s0 + $0x518] sm:$0xff]
    %v173 = vld [vmem:[%s0 + $0x520] sm:$0xff]
    %v174 = vld [vmem:[%s0 + $0x528] sm:$0xff]
    %v175 = vld [vmem:[%s0 + $0x530] sm:$0xff]
    %v176 = vld [vmem:[%s0 + $0x538] sm:$0xff]
    %v177 = vld [vmem:[%s0 + $0x540] sm:$0xff]
    %v178 = vld [vmem:[%s0 + $0x548] sm:$0xff]
    %v179 = vld [vmem:[%s0 + $0x550] sm:$0xff]
    %v180 = vld [vmem:[%s0 + $0x558] sm:$0xff]
    %v181 = vld [vmem:[%s0 + $0x560] sm:$0xff]
    %v182 = vld [vmem:[%s0 + $0x568] sm:$0xff]
    %v183 = vld [vmem:[%s0 + $0x570] sm:$0xff]
    %v184 = vld [vmem:[%s0 + $0x578] sm:$0xff]
    %v185 = vld [vmem:[%s0 + $0x580] sm:$0xff]
    %v186 = vld [vmem:[%s0 + $0x588] sm:$0xff]
    %v187 = vld [vmem:[%s0 + $0x590] sm:$0xff]
    %v188 = vld [vmem:[%s0 + $0x598] sm:$0xff]
    %v189 = vld [vmem:[%s0 + $0x5a0] sm:$0xff]
    %v190 = vld [vmem:[%s0 + $0x5a8] sm:$0xff]
    %v191 = vld [vmem:[%s0 + $0x5b0] sm:$0xff]
    %v192 = vld [vmem:[%s0 + $0x5b8] sm:$0xff]
    %v193 = vld [vmem:[%s0 + $0x5c0] sm:$0xff]
    %v194 = vld [vmem:[%s0 + $0x5c8] sm:$0xff]
    %v195 = vld [vmem:[%s0 + $0x5d0] sm:$0xff]
    %v196 = vld [vmem:[%s0 + $0x5d8] sm:$0xff]
    %v197 = vld [vmem:[%s0 + $0x5e0] sm:$0xff]
    %v198 = vld [vmem:[%s0 + $0x5e8] sm:$0xff]
    %v199 = vld [vmem:[%s0 + $0x5f0] sm:$0xff]
    %v200 = vld [vmem:[%s0 + $0x5f8] sm:$0xff]
    %v201 = vld [vmem:[%s0 + $0x600] sm:$0xff]
    %v202 = vld [vmem:[%s0 + $0x608] sm:$0xff]
    %v203 = vld [vmem:[%s0 + $0x610] sm:$0xff]
    %v204 = vld [vmem:[%s0 + $0x618] sm:$0xff]
    %v205 = vld [vmem:[%s0 + $0x620] sm:$0xff]
    %v206 = vld [vmem:[%s0 + $0x628] sm:$0xff]
    %v207 = vld [vmem:[%s0 + $0x630] sm:$0xff]
    %v208 = vld [vmem:[%s0 + $0x638] sm:$0xff]
    %v209 = vld [vmem:[%s0 + $0x640] sm:$0xff]
    %v210 = vld [vmem:[%s0 + $0x648] sm:$0xff]
    %v211 = vld [vmem:[%s0 + $0x650] sm:$0xff]
    %v212 = vld [vmem:[%s0 + $0x658] sm:$0xff]
    %v213 = vld [vmem:[%s0 + $0x660] sm:$0xff]
    %v214 = vld [vmem:[%s0 + $0x668] sm:$0xff]
    %v215 = vld [vmem:[%s0 + $0x670] sm:$0xff]
    %v216 = vld [vmem:[%s0 + $0x678] sm:$0xff]
    %v217 = vld [vmem:[%s0 + $0x680] sm:$0xff]
    %v218 = vld [vmem:[%s0 + $0x688] sm:$0xff]
    %v219 = vld [vmem:[%s0 + $0x690] sm:$0xff]
    %v220 = vld [vmem:[%s0 + $0x698] sm:$0xff]
    %v221 = vld [vmem:[%s0 + $0x6a0] sm:$0xff]
    %v222 = vld [vmem:[%s0 + $0x6a8] sm:$0xff]
    %v223 = vld [vmem:[%s0 + $0x6b0] sm:$0xff]
    %v224 = vld [vmem:[%s0 + $0x6b8] sm:$0xff]
    %v225 = vld [vmem:[%s0 + $0x6c0] sm:$0xff]
    %v226 = vld [vmem:[%s0 + $0x6c8] sm:$0xff]
    %v227 = vld [vmem:[%s0 + $0x6d0] sm:$0xff]
    %v228 = vld [vmem:[%s0 + $0x6d8] sm:$0xff]
    %v229 = vld [vmem:[%s0 + $0x6e0] sm:$0xff]
    %v230 = vld [vmem:[%s0 + $0x6e8] sm:$0xff]
    %v231 = vld [vmem:[%s0 + $0x6f0] sm:$0xff]
    %v232 = vld [vmem:[%s0 + $0x6f8] sm:$0xff]
    %v233 = vld [vmem:[%s0 + $0x700] sm:$0xff]
    %v234 = vld [vmem:[%s0 + $0x708] sm:$0xff]
    %v235 = vld [vmem:[%s0 + $0x710] sm:$0xff]
    %v236 = vld [vmem:[%s0 + $0x718] sm:$0xff]
    %v237 = vld [vmem:[%s0 + $0x720] sm:$0xff]
    %v238 = vld [vmem:[%s0 + $0x728] sm:$0xff]
    %v239 = vld [vmem:[%s0 + $0x730] sm:$0xff]
    %v240 = vld [vmem:[%s0 + $0x738] sm:$0xff]
    %v241 = vld [vmem:[%s0 + $0x740] sm:$0xff]
    %v242 = vld [vmem:[%s0 + $0x748] sm:$0xff]
    %v243 = vld [vmem:[%s0 + $0x750] sm:$0xff]
    %v244 = vld [vmem:[%s0 + $0x758] sm:$0xff]
    %v245 = vld [vmem:[%s0 + $0x760] sm:$0xff]
    %v246 = vld [vmem:[%s0 + $0x768] sm:$0xff]
    %v247 = vld [vmem:[%s0 + $0x770] sm:$0xff]
    %v248 = vld [vmem:[%s0 + $0x778] sm:$0xff]
    %v249 = vld [vmem:[%s0 + $0x780] sm:$0xff]
    %v250 = vld [vmem:[%s0 + $0x788] sm:$0xff]
    %v251 = vld [vmem:[%s0 + $0x790] sm:$0xff]
    %v252 = vld [vmem:[%s0 + $0x798] sm:$0xff]
    %v253 = vld [vmem:[%s0 + $0x7a0] sm:$0xff]
    %v254 = vld [vmem:[%s0 + $0x7a8] sm:$0xff]
    %v255 = vld [vmem:[%s0 + $0x7b0] sm:$0xff]
    %v256 = vld [vmem:[%s0 + $0x7b8] sm:$0xff]
    %v257 = vld [vmem:[%s0 + $0x7c0] sm:$0xff]
    %v258 = vld [vmem:[%s0 + $0x7c8] sm:$0xff]
    %v259 = vld [vmem:[%s0 + $0x7d0] sm:$0xff]
    %v260 = vld [vmem:[%s0 + $0x7d8] sm:$0xff]
    %v261 = vld [vmem:[%s0 + $0x7e0] sm:$0xff]
    %v262 = vld [vmem:[%s0 + $0x7e8] sm:$0xff]
    %v263 = vld [vmem:[%s0 + $0x7f0] sm:$0xff]
    %v264 = vld [vmem:[%s0 + $0x7f8] sm:$0xff]
    %vm265 = vcmask 64512
    %v266 = vsel %vm265, %v9, 0.0
    %v267 = vsel %vm265, %v10, 0.0
    %v268 = vadd.f32 %v266, %v267
    %v269 = vsel %vm265, %v11, 0.0
    %v270 = vadd.f32 %v268, %v269
    %v271 = vsel %vm265, %v12, 0.0
    %v272 = vadd.f32 %v270, %v271
    %v273 = vsel %vm265, %v13, 0.0
    %v274 = vadd.f32 %v272, %v273
    %v275 = vsel %vm265, %v14, 0.0
    %v276 = vadd.f32 %v274, %v275
    %v277 = vsel %vm265, %v15, 0.0
    %v278 = vadd.f32 %v276, %v277
    %v279 = vsel %vm265, %v16, 0.0
    %v280 = vadd.f32 %v278, %v279
    %v281 = vsel %vm265, %v17, 0.0
    %v282 = vadd.f32 %v280, %v281
    %v283 = vsel %vm265, %v18, 0.0
    %v284 = vadd.f32 %v282, %v283
    %v285 = vsel %vm265, %v19, 0.0
    %v286 = vadd.f32 %v284, %v285
    %v287 = vsel %vm265, %v20, 0.0
    %v288 = vadd.f32 %v286, %v287
    %v289 = vsel %vm265, %v21, 0.0
    %v290 = vadd.f32 %v288, %v289
    %v291 = vsel %vm265, %v22, 0.0
    %v292 = vadd.f32 %v290, %v291
    %v293 = vsel %vm265, %v23, 0.0
    %v294 = vadd.f32 %v292, %v293
    %v295 = vsel %vm265, %v24, 0.0
    %v296 = vadd.f32 %v294, %v295
    %v297 = vsel %vm265, %v25, 0.0
    %v298 = vadd.f32 %v296, %v297
    %v299 = vsel %vm265, %v26, 0.0
    %v300 = vadd.f32 %v298, %v299
    %v301 = vsel %vm265, %v27, 0.0
    %v302 = vadd.f32 %v300, %v301
    %v303 = vsel %vm265, %v28, 0.0
    %v304 = vadd.f32 %v302, %v303
    %v305 = vsel %vm265, %v29, 0.0
    %v306 = vadd.f32 %v304, %v305
    %v307 = vsel %vm265, %v30, 0.0
    %v308 = vadd.f32 %v306, %v307
    %v309 = vsel %vm265, %v31, 0.0
    %v310 = vadd.f32 %v308, %v309
    %v311 = vsel %vm265, %v32, 0.0
    %v312 = vadd.f32 %v310, %v311
    %v313 = vsel %vm265, %v33, 0.0
    %v314 = vadd.f32 %v312, %v313
    %v315 = vsel %vm265, %v34, 0.0
    %v316 = vadd.f32 %v314, %v315
    %v317 = vsel %vm265, %v35, 0.0
    %v318 = vadd.f32 %v316, %v317
    %v319 = vsel %vm265, %v36, 0.0
    %v320 = vadd.f32 %v318, %v319
    %v321 = vsel %vm265, %v37, 0.0
    %v322 = vadd.f32 %v320, %v321
    %v323 = vsel %vm265, %v38, 0.0
    %v324 = vadd.f32 %v322, %v323
    %v325 = vsel %vm265, %v39, 0.0
    %v326 = vadd.f32 %v324, %v325
    %v327 = vsel %vm265, %v40, 0.0
    %v328 = vadd.f32 %v326, %v327
    %v329 = vrot.slane %v328, 4
    %v330 = vadd.f32 %v328, %v329
    %v331 = vrot.slane %v330, 2
    %v332 = vadd.f32 %v330, %v331
    %v333 = vrot.slane %v332, 1
    %v334 = vadd.f32 %v332, %v333
    %v335 = vsel %vm265, %v41, 0.0
    %v336 = vsel %vm265, %v42, 0.0
    %v337 = vadd.f32 %v335, %v336
    %v338 = vsel %vm265, %v43, 0.0
    %v339 = vadd.f32 %v337, %v338
    %v340 = vsel %vm265, %v44, 0.0
    %v341 = vadd.f32 %v339, %v340
    %v342 = vsel %vm265, %v45, 0.0
    %v343 = vadd.f32 %v341, %v342
    %v344 = vsel %vm265, %v46, 0.0
    %v345 = vadd.f32 %v343, %v344
    %v346 = vsel %vm265, %v47, 0.0
    %v347 = vadd.f32 %v345, %v346
    %v348 = vsel %vm265, %v48, 0.0
    %v349 = vadd.f32 %v347, %v348
    %v350 = vsel %vm265, %v49, 0.0
    %v351 = vadd.f32 %v349, %v350
    %v352 = vsel %vm265, %v50, 0.0
    %v353 = vadd.f32 %v351, %v352
    %v354 = vsel %vm265, %v51, 0.0
    %v355 = vadd.f32 %v353, %v354
    %v356 = vsel %vm265, %v52, 0.0
    %v357 = vadd.f32 %v355, %v356
    %v358 = vsel %vm265, %v53, 0.0
    %v359 = vadd.f32 %v357, %v358
    %v360 = vsel %vm265, %v54, 0.0
    %v361 = vadd.f32 %v359, %v360
    %v362 = vsel %vm265, %v55, 0.0
    %v363 = vadd.f32 %v361, %v362
    %v364 = vsel %vm265, %v56, 0.0
    %v365 = vadd.f32 %v363, %v364
    %v366 = vsel %vm265, %v57, 0.0
    %v367 = vadd.f32 %v365, %v366
    %v368 = vsel %vm265, %v58, 0.0
    %v369 = vadd.f32 %v367, %v368
    %v370 = vsel %vm265, %v59, 0.0
    %v371 = vadd.f32 %v369, %v370
    %v372 = vsel %vm265, %v60, 0.0
    %v373 = vadd.f32 %v371, %v372
    %v374 = vsel %vm265, %v61, 0.0
    %v375 = vadd.f32 %v373, %v374
    %v376 = vsel %vm265, %v62, 0.0
    %v377 = vadd.f32 %v375, %v376
    %v378 = vsel %vm265, %v63, 0.0
    %v379 = vadd.f32 %v377, %v378
    %v380 = vsel %vm265, %v64, 0.0
    %v381 = vadd.f32 %v379, %v380
    %v382 = vsel %vm265, %v65, 0.0
    %v383 = vadd.f32 %v381, %v382
    %v384 = vsel %vm265, %v66, 0.0
    %v385 = vadd.f32 %v383, %v384
    %v386 = vsel %vm265, %v67, 0.0
    %v387 = vadd.f32 %v385, %v386
    %v388 = vsel %vm265, %v68, 0.0
    %v389 = vadd.f32 %v387, %v388
    %v390 = vsel %vm265, %v69, 0.0
    %v391 = vadd.f32 %v389, %v390
    %v392 = vsel %vm265, %v70, 0.0
    %v393 = vadd.f32 %v391, %v392
    %v394 = vsel %vm265, %v71, 0.0
    %v395 = vadd.f32 %v393, %v394
    %v396 = vsel %vm265, %v72, 0.0
    %v397 = vadd.f32 %v395, %v396
    %v398 = vrot.slane %v397, 4
    %v399 = vadd.f32 %v397, %v398
    %v400 = vrot.slane %v399, 2
    %v401 = vadd.f32 %v399, %v400
    %v402 = vrot.slane %v401, 1
    %v403 = vadd.f32 %v401, %v402
    %v404 = vsel %vm265, %v73, 0.0
    %v405 = vsel %vm265, %v74, 0.0
    %v406 = vadd.f32 %v404, %v405
    %v407 = vsel %vm265, %v75, 0.0
    %v408 = vadd.f32 %v406, %v407
    %v409 = vsel %vm265, %v76, 0.0
    %v410 = vadd.f32 %v408, %v409
    %v411 = vsel %vm265, %v77, 0.0
    %v412 = vadd.f32 %v410, %v411
    %v413 = vsel %vm265, %v78, 0.0
    %v414 = vadd.f32 %v412, %v413
    %v415 = vsel %vm265, %v79, 0.0
    %v416 = vadd.f32 %v414, %v415
    %v417 = vsel %vm265, %v80, 0.0
    %v418 = vadd.f32 %v416, %v417
    %v419 = vsel %vm265, %v81, 0.0
    %v420 = vadd.f32 %v418, %v419
    %v421 = vsel %vm265, %v82, 0.0
    %v422 = vadd.f32 %v420, %v421
    %v423 = vsel %vm265, %v83, 0.0
    %v424 = vadd.f32 %v422, %v423
    %v425 = vsel %vm265, %v84, 0.0
    %v426 = vadd.f32 %v424, %v425
    %v427 = vsel %vm265, %v85, 0.0
    %v428 = vadd.f32 %v426, %v427
    %v429 = vsel %vm265, %v86, 0.0
    %v430 = vadd.f32 %v428, %v429
    %v431 = vsel %vm265, %v87, 0.0
    %v432 = vadd.f32 %v430, %v431
    %v433 = vsel %vm265, %v88, 0.0
    %v434 = vadd.f32 %v432, %v433
    %v435 = vsel %vm265, %v89, 0.0
    %v436 = vadd.f32 %v434, %v435
    %v437 = vsel %vm265, %v90, 0.0
    %v438 = vadd.f32 %v436, %v437
    %v439 = vsel %vm265, %v91, 0.0
    %v440 = vadd.f32 %v438, %v439
    %v441 = vsel %vm265, %v92, 0.0
    %v442 = vadd.f32 %v440, %v441
    %v443 = vsel %vm265, %v93, 0.0
    %v444 = vadd.f32 %v442, %v443
    %v445 = vsel %vm265, %v94, 0.0
    %v446 = vadd.f32 %v444, %v445
    %v447 = vsel %vm265, %v95, 0.0
    %v448 = vadd.f32 %v446, %v447
    %v449 = vsel %vm265, %v96, 0.0
    %v450 = vadd.f32 %v448, %v449
    %v451 = vsel %vm265, %v97, 0.0
    %v452 = vadd.f32 %v450, %v451
    %v453 = vsel %vm265, %v98, 0.0
    %v454 = vadd.f32 %v452, %v453
    %v455 = vsel %vm265, %v99, 0.0
    %v456 = vadd.f32 %v454, %v455
    %v457 = vsel %vm265, %v100, 0.0
    %v458 = vadd.f32 %v456, %v457
    %v459 = vsel %vm265, %v101, 0.0
    %v460 = vadd.f32 %v458, %v459
    %v461 = vsel %vm265, %v102, 0.0
    %v462 = vadd.f32 %v460, %v461
    %v463 = vsel %vm265, %v103, 0.0
    %v464 = vadd.f32 %v462, %v463
    %v465 = vsel %vm265, %v104, 0.0
    %v466 = vadd.f32 %v464, %v465
    %v467 = vrot.slane %v466, 4
    %v468 = vadd.f32 %v466, %v467
    %v469 = vrot.slane %v468, 2
    %v470 = vadd.f32 %v468, %v469
    %v471 = vrot.slane %v470, 1
    %v472 = vadd.f32 %v470, %v471
    %v473 = vsel %vm265, %v105, 0.0
    %v474 = vsel %vm265, %v106, 0.0
    %v475 = vadd.f32 %v473, %v474
    %v476 = vsel %vm265, %v107, 0.0
    %v477 = vadd.f32 %v475, %v476
    %v478 = vsel %vm265, %v108, 0.0
    %v479 = vadd.f32 %v477, %v478
    %v480 = vsel %vm265, %v109, 0.0
    %v481 = vadd.f32 %v479, %v480
    %v482 = vsel %vm265, %v110, 0.0
    %v483 = vadd.f32 %v481, %v482
    %v484 = vsel %vm265, %v111, 0.0
    %v485 = vadd.f32 %v483, %v484
    %v486 = vsel %vm265, %v112, 0.0
    %v487 = vadd.f32 %v485, %v486
    %v488 = vsel %vm265, %v113, 0.0
    %v489 = vadd.f32 %v487, %v488
    %v490 = vsel %vm265, %v114, 0.0
    %v491 = vadd.f32 %v489, %v490
    %v492 = vsel %vm265, %v115, 0.0
    %v493 = vadd.f32 %v491, %v492
    %v494 = vsel %vm265, %v116, 0.0
    %v495 = vadd.f32 %v493, %v494
    %v496 = vsel %vm265, %v117, 0.0
    %v497 = vadd.f32 %v495, %v496
    %v498 = vsel %vm265, %v118, 0.0
    %v499 = vadd.f32 %v497, %v498
    %v500 = vsel %vm265, %v119, 0.0
    %v501 = vadd.f32 %v499, %v500
    %v502 = vsel %vm265, %v120, 0.0
    %v503 = vadd.f32 %v501, %v502
    %v504 = vsel %vm265, %v121, 0.0
    %v505 = vadd.f32 %v503, %v504
    %v506 = vsel %vm265, %v122, 0.0
    %v507 = vadd.f32 %v505, %v506
    %v508 = vsel %vm265, %v123, 0.0
    %v509 = vadd.f32 %v507, %v508
    %v510 = vsel %vm265, %v124, 0.0
    %v511 = vadd.f32 %v509, %v510
    %v512 = vsel %vm265, %v125, 0.0
    %v513 = vadd.f32 %v511, %v512
    %v514 = vsel %vm265, %v126, 0.0
    %v515 = vadd.f32 %v513, %v514
    %v516 = vsel %vm265, %v127, 0.0
    %v517 = vadd.f32 %v515, %v516
    %v518 = vsel %vm265, %v128, 0.0
    %v519 = vadd.f32 %v517, %v518
    %v520 = vsel %vm265, %v129, 0.0
    %v521 = vadd.f32 %v519, %v520
    %v522 = vsel %vm265, %v130, 0.0
    %v523 = vadd.f32 %v521, %v522
    %v524 = vsel %vm265, %v131, 0.0
    %v525 = vadd.f32 %v523, %v524
    %v526 = vsel %vm265, %v132, 0.0
    %v527 = vadd.f32 %v525, %v526
    %v528 = vsel %vm265, %v133, 0.0
    %v529 = vadd.f32 %v527, %v528
    %v530 = vsel %vm265, %v134, 0.0
    %v531 = vadd.f32 %v529, %v530
    %v532 = vsel %vm265, %v135, 0.0
    %v533 = vadd.f32 %v531, %v532
    %v534 = vsel %vm265, %v136, 0.0
    %v535 = vadd.f32 %v533, %v534
    %v536 = vrot.slane %v535, 4
    %v537 = vadd.f32 %v535, %v536
    %v538 = vrot.slane %v537, 2
    %v539 = vadd.f32 %v537, %v538
    %v540 = vrot.slane %v539, 1
    %v541 = vadd.f32 %v539, %v540
    %v542 = vsel %vm265, %v137, 0.0
    %v543 = vsel %vm265, %v138, 0.0
    %v544 = vadd.f32 %v542, %v543
    %v545 = vsel %vm265, %v139, 0.0
    %v546 = vadd.f32 %v544, %v545
    %v547 = vsel %vm265, %v140, 0.0
    %v548 = vadd.f32 %v546, %v547
    %v549 = vsel %vm265, %v141, 0.0
    %v550 = vadd.f32 %v548, %v549
    %v551 = vsel %vm265, %v142, 0.0
    %v552 = vadd.f32 %v550, %v551
    %v553 = vsel %vm265, %v143, 0.0
    %v554 = vadd.f32 %v552, %v553
    %v555 = vsel %vm265, %v144, 0.0
    %v556 = vadd.f32 %v554, %v555
    %v557 = vsel %vm265, %v145, 0.0
    %v558 = vadd.f32 %v556, %v557
    %v559 = vsel %vm265, %v146, 0.0
    %v560 = vadd.f32 %v558, %v559
    %v561 = vsel %vm265, %v147, 0.0
    %v562 = vadd.f32 %v560, %v561
    %v563 = vsel %vm265, %v148, 0.0
    %v564 = vadd.f32 %v562, %v563
    %v565 = vsel %vm265, %v149, 0.0
    %v566 = vadd.f32 %v564, %v565
    %v567 = vsel %vm265, %v150, 0.0
    %v568 = vadd.f32 %v566, %v567
    %v569 = vsel %vm265, %v151, 0.0
    %v570 = vadd.f32 %v568, %v569
    %v571 = vsel %vm265, %v152, 0.0
    %v572 = vadd.f32 %v570, %v571
    %v573 = vsel %vm265, %v153, 0.0
    %v574 = vadd.f32 %v572, %v573
    %v575 = vsel %vm265, %v154, 0.0
    %v576 = vadd.f32 %v574, %v575
    %v577 = vsel %vm265, %v155, 0.0
    %v578 = vadd.f32 %v576, %v577
    %v579 = vsel %vm265, %v156, 0.0
    %v580 = vadd.f32 %v578, %v579
    %v581 = vsel %vm265, %v157, 0.0
    %v582 = vadd.f32 %v580, %v581
    %v583 = vsel %vm265, %v158, 0.0
    %v584 = vadd.f32 %v582, %v583
    %v585 = vsel %vm265, %v159, 0.0
    %v586 = vadd.f32 %v584, %v585
    %v587 = vsel %vm265, %v160, 0.0
    %v588 = vadd.f32 %v586, %v587
    %v589 = vsel %vm265, %v161, 0.0
    %v590 = vadd.f32 %v588, %v589
    %v591 = vsel %vm265, %v162, 0.0
    %v592 = vadd.f32 %v590, %v591
    %v593 = vsel %vm265, %v163, 0.0
    %v594 = vadd.f32 %v592, %v593
    %v595 = vsel %vm265, %v164, 0.0
    %v596 = vadd.f32 %v594, %v595
    %v597 = vsel %vm265, %v165, 0.0
    %v598 = vadd.f32 %v596, %v597
    %v599 = vsel %vm265, %v166, 0.0
    %v600 = vadd.f32 %v598, %v599
    %v601 = vsel %vm265, %v167, 0.0
    %v602 = vadd.f32 %v600, %v601
    %v603 = vsel %vm265, %v168, 0.0
    %v604 = vadd.f32 %v602, %v603
    %v605 = vrot.slane %v604, 4
    %v606 = vadd.f32 %v604, %v605
    %v607 = vrot.slane %v606, 2
    %v608 = vadd.f32 %v606, %v607
    %v609 = vrot.slane %v608, 1
    %v610 = vadd.f32 %v608, %v609
    %v611 = vsel %vm265, %v169, 0.0
    %v612 = vsel %vm265, %v170, 0.0
    %v613 = vadd.f32 %v611, %v612
    %v614 = vsel %vm265, %v171, 0.0
    %v615 = vadd.f32 %v613, %v614
    %v616 = vsel %vm265, %v172, 0.0
    %v617 = vadd.f32 %v615, %v616
    %v618 = vsel %vm265, %v173, 0.0
    %v619 = vadd.f32 %v617, %v618
    %v620 = vsel %vm265, %v174, 0.0
    %v621 = vadd.f32 %v619, %v620
    %v622 = vsel %vm265, %v175, 0.0
    %v623 = vadd.f32 %v621, %v622
    %v624 = vsel %vm265, %v176, 0.0
    %v625 = vadd.f32 %v623, %v624
    %v626 = vsel %vm265, %v177, 0.0
    %v627 = vadd.f32 %v625, %v626
    %v628 = vsel %vm265, %v178, 0.0
    %v629 = vadd.f32 %v627, %v628
    %v630 = vsel %vm265, %v179, 0.0
    %v631 = vadd.f32 %v629, %v630
    %v632 = vsel %vm265, %v180, 0.0
    %v633 = vadd.f32 %v631, %v632
    %v634 = vsel %vm265, %v181, 0.0
    %v635 = vadd.f32 %v633, %v634
    %v636 = vsel %vm265, %v182, 0.0
    %v637 = vadd.f32 %v635, %v636
    %v638 = vsel %vm265, %v183, 0.0
    %v639 = vadd.f32 %v637, %v638
    %v640 = vsel %vm265, %v184, 0.0
    %v641 = vadd.f32 %v639, %v640
    %v642 = vsel %vm265, %v185, 0.0
    %v643 = vadd.f32 %v641, %v642
    %v644 = vsel %vm265, %v186, 0.0
    %v645 = vadd.f32 %v643, %v644
    %v646 = vsel %vm265, %v187, 0.0
    %v647 = vadd.f32 %v645, %v646
    %v648 = vsel %vm265, %v188, 0.0
    %v649 = vadd.f32 %v647, %v648
    %v650 = vsel %vm265, %v189, 0.0
    %v651 = vadd.f32 %v649, %v650
    %v652 = vsel %vm265, %v190, 0.0
    %v653 = vadd.f32 %v651, %v652
    %v654 = vsel %vm265, %v191, 0.0
    %v655 = vadd.f32 %v653, %v654
    %v656 = vsel %vm265, %v192, 0.0
    %v657 = vadd.f32 %v655, %v656
    %v658 = vsel %vm265, %v193, 0.0
    %v659 = vadd.f32 %v657, %v658
    %v660 = vsel %vm265, %v194, 0.0
    %v661 = vadd.f32 %v659, %v660
    %v662 = vsel %vm265, %v195, 0.0
    %v663 = vadd.f32 %v661, %v662
    %v664 = vsel %vm265, %v196, 0.0
    %v665 = vadd.f32 %v663, %v664
    %v666 = vsel %vm265, %v197, 0.0
    %v667 = vadd.f32 %v665, %v666
    %v668 = vsel %vm265, %v198, 0.0
    %v669 = vadd.f32 %v667, %v668
    %v670 = vsel %vm265, %v199, 0.0
    %v671 = vadd.f32 %v669, %v670
    %v672 = vsel %vm265, %v200, 0.0
    %v673 = vadd.f32 %v671, %v672
    %v674 = vrot.slane %v673, 4
    %v675 = vadd.f32 %v673, %v674
    %v676 = vrot.slane %v675, 2
    %v677 = vadd.f32 %v675, %v676
    %v678 = vrot.slane %v677, 1
    %v679 = vadd.f32 %v677, %v678
    %v680 = vsel %vm265, %v201, 0.0
    %v681 = vsel %vm265, %v202, 0.0
    %v682 = vadd.f32 %v680, %v681
    %v683 = vsel %vm265, %v203, 0.0
    %v684 = vadd.f32 %v682, %v683
    %v685 = vsel %vm265, %v204, 0.0
    %v686 = vadd.f32 %v684, %v685
    %v687 = vsel %vm265, %v205, 0.0
    %v688 = vadd.f32 %v686, %v687
    %v689 = vsel %vm265, %v206, 0.0
    %v690 = vadd.f32 %v688, %v689
    %v691 = vsel %vm265, %v207, 0.0
    %v692 = vadd.f32 %v690, %v691
    %v693 = vsel %vm265, %v208, 0.0
    %v694 = vadd.f32 %v692, %v693
    %v695 = vsel %vm265, %v209, 0.0
    %v696 = vadd.f32 %v694, %v695
    %v697 = vsel %vm265, %v210, 0.0
    %v698 = vadd.f32 %v696, %v697
    %v699 = vsel %vm265, %v211, 0.0
    %v700 = vadd.f32 %v698, %v699
    %v701 = vsel %vm265, %v212, 0.0
    %v702 = vadd.f32 %v700, %v701
    %v703 = vsel %vm265, %v213, 0.0
    %v704 = vadd.f32 %v702, %v703
    %v705 = vsel %vm265, %v214, 0.0
    %v706 = vadd.f32 %v704, %v705
    %v707 = vsel %vm265, %v215, 0.0
    %v708 = vadd.f32 %v706, %v707
    %v709 = vsel %vm265, %v216, 0.0
    %v710 = vadd.f32 %v708, %v709
    %v711 = vsel %vm265, %v217, 0.0
    %v712 = vadd.f32 %v710, %v711
    %v713 = vsel %vm265, %v218, 0.0
    %v714 = vadd.f32 %v712, %v713
    %v715 = vsel %vm265, %v219, 0.0
    %v716 = vadd.f32 %v714, %v715
    %v717 = vsel %vm265, %v220, 0.0
    %v718 = vadd.f32 %v716, %v717
    %v719 = vsel %vm265, %v221, 0.0
    %v720 = vadd.f32 %v718, %v719
    %v721 = vsel %vm265, %v222, 0.0
    %v722 = vadd.f32 %v720, %v721
    %v723 = vsel %vm265, %v223, 0.0
    %v724 = vadd.f32 %v722, %v723
    %v725 = vsel %vm265, %v224, 0.0
    %v726 = vadd.f32 %v724, %v725
    %v727 = vsel %vm265, %v225, 0.0
    %v728 = vadd.f32 %v726, %v727
    %v729 = vsel %vm265, %v226, 0.0
    %v730 = vadd.f32 %v728, %v729
    %v731 = vsel %vm265, %v227, 0.0
    %v732 = vadd.f32 %v730, %v731
    %v733 = vsel %vm265, %v228, 0.0
    %v734 = vadd.f32 %v732, %v733
    %v735 = vsel %vm265, %v229, 0.0
    %v736 = vadd.f32 %v734, %v735
    %v737 = vsel %vm265, %v230, 0.0
    %v738 = vadd.f32 %v736, %v737
    %v739 = vsel %vm265, %v231, 0.0
    %v740 = vadd.f32 %v738, %v739
    %v741 = vsel %vm265, %v232, 0.0
    %v742 = vadd.f32 %v740, %v741
    %v743 = vrot.slane %v742, 4
    %v744 = vadd.f32 %v742, %v743
    %v745 = vrot.slane %v744, 2
    %v746 = vadd.f32 %v744, %v745
    %v747 = vrot.slane %v746, 1
    %v748 = vadd.f32 %v746, %v747
    %v749 = vsel %vm265, %v233, 0.0
    %v750 = vsel %vm265, %v234, 0.0
    %v751 = vadd.f32 %v749, %v750
    %v752 = vsel %vm265, %v235, 0.0
    %v753 = vadd.f32 %v751, %v752
    %v754 = vsel %vm265, %v236, 0.0
    %v755 = vadd.f32 %v753, %v754
    %v756 = vsel %vm265, %v237, 0.0
    %v757 = vadd.f32 %v755, %v756
    %v758 = vsel %vm265, %v238, 0.0
    %v759 = vadd.f32 %v757, %v758
    %v760 = vsel %vm265, %v239, 0.0
    %v761 = vadd.f32 %v759, %v760
    %v762 = vsel %vm265, %v240, 0.0
    %v763 = vadd.f32 %v761, %v762
    %v764 = vsel %vm265, %v241, 0.0
    %v765 = vadd.f32 %v763, %v764
    %v766 = vsel %vm265, %v242, 0.0
    %v767 = vadd.f32 %v765, %v766
    %v768 = vsel %vm265, %v243, 0.0
    %v769 = vadd.f32 %v767, %v768
    %v770 = vsel %vm265, %v244, 0.0
    %v771 = vadd.f32 %v769, %v770
    %v772 = vsel %vm265, %v245, 0.0
    %v773 = vadd.f32 %v771, %v772
    %v774 = vsel %vm265, %v246, 0.0
    %v775 = vadd.f32 %v773, %v774
    %v776 = vsel %vm265, %v247, 0.0
    %v777 = vadd.f32 %v775, %v776
    %v778 = vsel %vm265, %v248, 0.0
    %v779 = vadd.f32 %v777, %v778
    %v780 = vsel %vm265, %v249, 0.0
    %v781 = vadd.f32 %v779, %v780
    %v782 = vsel %vm265, %v250, 0.0
    %v783 = vadd.f32 %v781, %v782
    %v784 = vsel %vm265, %v251, 0.0
    %v785 = vadd.f32 %v783, %v784
    %v786 = vsel %vm265, %v252, 0.0
    %v787 = vadd.f32 %v785, %v786
    %v788 = vsel %vm265, %v253, 0.0
    %v789 = vadd.f32 %v787, %v788
    %v790 = vsel %vm265, %v254, 0.0
    %v791 = vadd.f32 %v789, %v790
    %v792 = vsel %vm265, %v255, 0.0
    %v793 = vadd.f32 %v791, %v792
    %v794 = vsel %vm265, %v256, 0.0
    %v795 = vadd.f32 %v793, %v794
    %v796 = vsel %vm265, %v257, 0.0
    %v797 = vadd.f32 %v795, %v796
    %v798 = vsel %vm265, %v258, 0.0
    %v799 = vadd.f32 %v797, %v798
    %v800 = vsel %vm265, %v259, 0.0
    %v801 = vadd.f32 %v799, %v800
    %v802 = vsel %vm265, %v260, 0.0
    %v803 = vadd.f32 %v801, %v802
    %v804 = vsel %vm265, %v261, 0.0
    %v805 = vadd.f32 %v803, %v804
    %v806 = vsel %vm265, %v262, 0.0
    %v807 = vadd.f32 %v805, %v806
    %v808 = vsel %vm265, %v263, 0.0
    %v809 = vadd.f32 %v807, %v808
    %v810 = vsel %vm265, %v264, 0.0
    %v811 = vadd.f32 %v809, %v810
    %v812 = vrot.slane %v811, 4
    %v813 = vadd.f32 %v811, %v812
    %v814 = vrot.slane %v813, 2
    %v815 = vadd.f32 %v813, %v814
    %v816 = vrot.slane %v815, 1
    %v817 = vadd.f32 %v815, %v816
    %v818 = vmul.f32 %v334, 0.00390625
    %v819 = vmul.f32 %v403, 0.00390625
    %v820 = vmul.f32 %v472, 0.00390625
    %v821 = vmul.f32 %v541, 0.00390625
    %v822 = vmul.f32 %v610, 0.00390625
    %v823 = vmul.f32 %v679, 0.00390625
    %v824 = vmul.f32 %v748, 0.00390625
    %v825 = vmul.f32 %v817, 0.00390625
    %vm834 = vcmask 1041409
    %v835 = vsel %vm834, %v819, %v818
    %vm836 = vcmask 1042434
    %v837 = vsel %vm836, %v820, %v835
    %vm838 = vcmask 1043459
    %v839 = vsel %vm838, %v821, %v837
    %vm840 = vcmask 1044484
    %v841 = vsel %vm840, %v822, %v839
    %vm842 = vcmask 1045509
    %v843 = vsel %vm842, %v823, %v841
    %vm844 = vcmask 1046534
    %v845 = vsel %vm844, %v824, %v843
    %vm846 = vcmask 1047559
    %v847 = vsel %vm846, %v825, %v845
    %849 = vst.msk [vmem:[#allocation2] sm:$0xff] %vm265, %v847
    // Predicated region
    $region6: #{tpu_custom_call.1} parent=1 // pred_check
      _
    $region7: #{tpu_custom_call.1} parent=1 // pred_check_branch
      %851 = sbr.rel (0) target = $region9
    $region8: #{tpu_custom_call.1} parent=1 // pred_region
      %s853 = ssub.s32 128, 128
      %854 = vsyncadd [#allocation3], %s853
      %s856 = sshll.u32 [#allocation2], 4
      %s857 = int_to_ptr.vmem [resolvable:$true] %s856
      %859 = dma.vmem_to_hbm [thread:$0]  %s857, 128, %s1, [#allocation3]
    $region9: #{tpu_custom_call.1} parent=1 // pred_fallthru
      _
    // Predicated region
    $region10: #{tpu_custom_call.1} parent=1 // pred_check
      _
    $region11: #{tpu_custom_call.1} parent=1 // pred_check_branch
      %861 = sbr.rel (0) target = $region13
    $region12: #{tpu_custom_call.1} parent=1 // pred_region
      %862 = dma.done [#allocation3], 128
    $region13: #{tpu_custom_call.1} parent=1 // pred_fallthru
      _
    %863 = vsyncpa [#allocation3], 1

</llo_original>
